<compile_context>
chip_gen: v5e
topology: v5e:2x2
jax: 0.10.0
libtpu: 0.0.40
codegen_flags: <defaults>
</compile_context>

<pallas_src>
import jax
import jax.numpy as jnp
from jax.experimental import pallas as pl
from jax.experimental.pallas import tpu as pltpu


def _attn_meanpool_kernel(x_ref, w_ref, b_ref, out_ref, acc_ref):
    # x_ref:  (bt, S, tk) f32   (cast to bf16 in-kernel)
    # w_ref:  (tk, 3D)    bf16  (Wq^T | Wk^T | Wv^T)
    # b_ref:  (1, 3D)     f32   (bq | bk | bv)
    # out_ref:(bt, D)     f32
    # acc_ref:(bt*S, 3D)  f32 scratch, resident across the k grid axis.
    k_step = pl.program_id(1)

    @pl.when(k_step == 0)
    def _init():
        # Fold the bias into the accumulator init: removes three full-size
        # VALU adds from the per-tile epilogue (init is off the critical path).
        acc_ref[...] = jnp.broadcast_to(b_ref[...], acc_ref.shape)

    bt, s, tk = x_ref.shape
    # Collapse (bt, S) -> bt*S rows for the MXU.  Layout no-op when S % 8 == 0.
    x2 = x_ref[...].reshape(bt * s, tk).astype(jnp.bfloat16)
    # One fused Q|K|V projection per k-step: x2 is read from VMEM once and the
    # MXU sees a single tall (bt*S, tk) x (tk, 3D) matmul with f32 accumulate.
    acc_ref[...] += jnp.dot(x2, w_ref[...], preferred_element_type=jnp.float32)

    @pl.when(k_step == pl.num_programs(1) - 1)
    def _finalize():
        d = out_ref.shape[-1]
        qkv = acc_ref[...].reshape(bt, s, 3 * d)
        q = qkv[:, :, :d].astype(jnp.bfloat16)
        k = qkv[:, :, d:2 * d].astype(jnp.bfloat16)
        v = qkv[:, :, 2 * d:].astype(jnp.bfloat16)
        # No 1/sqrt(D) scaling: mirrors the PyTorch module exactly.
        scores = jnp.einsum('bqd,bkd->bqk', q, k,
                            preferred_element_type=jnp.float32)
        m = jnp.max(scores, axis=-1, keepdims=True)
        e = jnp.exp(scores - m)
        denom = jnp.sum(e, axis=-1, keepdims=True)
        attn = e * pl.reciprocal(denom, approx=True)      # EUP, not VALU divide
        # permute + AdaptiveAvgPool1d(1) + squeeze == mean over S.  The mean is
        # linear, so fold it into the attention weights before the 2nd matmul:
        # (1, S) @ (S, D) instead of (S, S) @ (S, D) + mean.
        wmean = jnp.mean(attn, axis=1, keepdims=True).astype(jnp.bfloat16)
        pooled = jnp.einsum('bqk,bkd->bqd', wmean, v,
                            preferred_element_type=jnp.float32)   # (bt, 1, D)
        out_ref[...] = pooled.reshape(bt, d).astype(out_ref.dtype)


def _vmem_capacity_bytes():
    try:
        cap = int(pltpu.get_tpu_info().vmem_capacity_bytes)
        if cap > 0:
            return cap
    except Exception:
        pass
    return 64 * 1024 * 1024          # conservative fallback (v7x per-core VMEM)


def _choose_tk(D, cap):
    """Weight K-tile: full D when small, else the largest lane-aligned divisor."""
    if D <= cap:
        return D
    t = (cap // 128) * 128
    while t >= 128:
        if D % t == 0:
            return t
        t -= 128
    return D


def _choose_bt(B, S, target_rows, acc_budget_bytes, acc_row_bytes):
    """Batch elements per tile (never 1 for B>1; output block stays sublane-legal)."""
    per_batch = S * acc_row_bytes
    max_batch = max(1, acc_budget_bytes // max(1, per_batch))
    if B <= max_batch:
        # Whole batch fits in one accumulator -> weights streamed exactly once.
        # Split in two only if both halves still clear the roofline row target,
        # so v7x's second TensorCore gets a "parallel" tile (no-op on v5e/v6e).
        half = B // 2
        if B % 2 == 0 and half % 8 == 0 and half * S >= target_rows:
            return half
        return B
    # Multiple tiles: balance them (minimize batch padding) and keep bt a
    # multiple of 8 so the (bt, D) output block is sublane-legal.
    n_tiles = pl.cdiv(B, max_batch)
    bt = pl.cdiv(B, n_tiles)
    return max(8, pl.cdiv(bt, 8) * 8)


def al_seqnet_forward(x, params):
    """x: (B, S, D) float32. params: torch-layout ((W:(out,in), b:(out,)),)*3."""
    B, S, D = x.shape
    (wq, bq), (wk, bk), (wv, bv) = params

    vmem_cap = _vmem_capacity_bytes()
    big_vmem = vmem_cap >= 96 * 1024 * 1024        # v5e/v6e: 128 MiB, v7x: 64 MiB
    target_rows = 768 if big_vmem else 384         # HBM/MXU balance point rows
    tk_cap = 512 if big_vmem else 256
    acc_budget = int(0.40 * vmem_cap)              # f32 QKV accumulator budget

    tk = _choose_tk(D, tk_cap)
    if D % tk != 0:
        tk = D
    n_k = D // tk
    bt = _choose_bt(B, S, target_rows, acc_budget, 3 * D * 4)
    n_bt = pl.cdiv(B, bt)
    B_pad = n_bt * bt
    # TODO(synk): if S*D is so large that even bt=8 overflows VMEM, split into a
    # weight-resident projection GEMM kernel + a separate attention/pool kernel.

    x_pad = x if B_pad == B else jnp.pad(x, ((0, B_pad - B), (0, 0), (0, 0)))

    # Fused bf16 weight (Wq^T | Wk^T | Wv^T) and fused f32 bias.
    w_cat = jnp.concatenate([wq.T, wk.T, wv.T], axis=1).astype(jnp.bfloat16)
    b_cat = jnp.concatenate([bq, bk, bv]).reshape(1, 3 * D).astype(jnp.float32)

    flops = int(B_pad * (6 * S * D * D + 2 * S * S * D + 2 * S * D))
    bytes_accessed = int(4 * B_pad * S * D + n_bt * 3 * D * D * 2
                         + 3 * D * 4 + 4 * B_pad * D)
    cost = pl.CostEstimate(flops=flops, transcendentals=int(B_pad * S * S),
                           bytes_accessed=bytes_accessed)

    vmem_need = (2 * bt * S * tk * 4          # x blocks (double-buffered, f32)
                 + 2 * tk * 3 * D * 2         # weight blocks (double-buffered)
                 + 2 * 3 * D * 4              # bias blocks
                 + bt * S * 3 * D * 4         # QKV f32 accumulator scratch
                 + 2 * bt * D * 4)            # output blocks
    compiler_kwargs = dict(dimension_semantics=("parallel", "arbitrary"))
    if vmem_need > 16 * 1024 * 1024:
        # Never ask for more than the physical device VMEM (85% => headroom for
        # Mosaic internal scratch); fixes the previous 100 MiB-on-v7x bug.
        compiler_kwargs["vmem_limit_bytes"] = int(
            min(max(vmem_need * 1.25, 32 * 1024 * 1024), vmem_cap * 0.85))

    out = pl.pallas_call(
        _attn_meanpool_kernel,
        out_shape=jax.ShapeDtypeStruct((B_pad, D), jnp.float32),
        grid=(n_bt, n_k),
        in_specs=[
            pl.BlockSpec((bt, S, tk), lambda b, k: (b, 0, k)),   # x (f32)
            pl.BlockSpec((tk, 3 * D), lambda b, k: (k, 0)),      # Wq^T|Wk^T|Wv^T
            pl.BlockSpec((1, 3 * D), lambda b, k: (0, 0)),       # bq|bk|bv
        ],
        out_specs=pl.BlockSpec((bt, D), lambda b, k: (b, 0)),
        scratch_shapes=[pltpu.VMEM((bt * S, 3 * D), jnp.float32)],
        compiler_params=pltpu.CompilerParams(**compiler_kwargs),
        cost_estimate=cost,
    )(x_pad, w_cat, b_cat)
    return out[:B]


def al_seqnet_reference(x, params):
    """Pure-JAX f32 reference mirroring the PyTorch forward exactly."""
    (wq, bq), (wk, bk), (wv, bv) = params
    q = x @ wq.T + bq
    k = x @ wk.T + bk
    v = x @ wv.T + bv
    scores = q @ jnp.swapaxes(k, -1, -2)
    attn = jax.nn.softmax(scores, axis=-1)
    att = attn @ v                      # (B, S, D)
    return jnp.mean(att, axis=1)        # permute + AdaptiveAvgPool1d(1) + squeeze


def al_seqnet_mirror_reference(x, params):
    """Pure-JAX mirror of the kernel's numerics (same bf16 cast points, f32
    accumulation) -- used for the tight correctness check."""
    (wq, bq), (wk, bk), (wv, bv) = params
    D = x.shape[-1]
    w_cat = jnp.concatenate([wq.T, wk.T, wv.T], axis=1).astype(jnp.bfloat16)
    b_cat = jnp.concatenate([bq, bk, bv]).astype(jnp.float32)
    qkv = jnp.einsum('bsk,kn->bsn', x.astype(jnp.bfloat16), w_cat,
                     preferred_element_type=jnp.float32) + b_cat
    q = qkv[..., :D].astype(jnp.bfloat16)
    k = qkv[..., D:2 * D].astype(jnp.bfloat16)
    v = qkv[..., 2 * D:].astype(jnp.bfloat16)
    scores = jnp.einsum('bqd,bkd->bqk', q, k, preferred_element_type=jnp.float32)
    attn = jax.nn.softmax(scores, axis=-1)
    wmean = jnp.mean(attn, axis=1, keepdims=True).astype(jnp.bfloat16)
    pooled = jnp.einsum('bqk,bkd->bqd', wmean, v,
                        preferred_element_type=jnp.float32)
    return pooled[:, 0, :]


if __name__ == "__main__":
    # Small synthetic shapes.  The PyTorch module hardcodes the attention dim
    # to 4096; D=128 keeps the test small while preserving the exact structure
    # (the kernel tiles D / the batch for the real 4096 case).
    B, S, D = 2, 8, 128
    key = jax.random.PRNGKey(0)
    kx, kq, kbq, kk, kbk, kv, kbv = jax.random.split(key, 7)

    x = jax.random.normal(kx, (B, S, D), dtype=jnp.float32)
    scale = 1.0 / jnp.sqrt(D)
    params = (
        (jax.random.uniform(kq, (D, D), jnp.float32, -scale, scale),
         jax.random.uniform(kbq, (D,), jnp.float32, -scale, scale)),
        (jax.random.uniform(kk, (D, D), jnp.float32, -scale, scale),
         jax.random.uniform(kbk, (D,), jnp.float32, -scale, scale)),
        (jax.random.uniform(kv, (D, D), jnp.float32, -scale, scale),
         jax.random.uniform(kbv, (D,), jnp.float32, -scale, scale)),
    )
    # TODO(synk): self.conv (Conv1d) and self.w are defined but never used in
    # forward(); they are intentionally not implemented.

    out = jax.block_until_ready(al_seqnet_forward(x, params))
    assert out.shape == (B, D), out.shape

    # Tight check against a reference that mirrors the kernel's bf16 cast points
    # (remaining divergence: approx reciprocal + accumulation order).
    ref_mirror = jax.block_until_ready(al_seqnet_mirror_reference(x, params))
    assert jnp.allclose(out, ref_mirror, atol=5e-3, rtol=5e-3), (
        "mirror-ref max diff", float(jnp.max(jnp.abs(out - ref_mirror))))

    # Loose sanity check against the pure f32 PyTorch-equivalent math
    # (divergence here is dominated by the intentional bf16 MXU inputs).
    ref_f32 = jax.block_until_ready(al_seqnet_reference(x, params))
    assert jnp.allclose(out, ref_f32, atol=5e-2, rtol=5e-2), (
        "f32-ref max diff", float(jnp.max(jnp.abs(out - ref_f32))))

    print("KERNEL_OK")
</pallas_src>

<mosaic_0001>
module attributes {stable_mosaic.version = 11 : i64} {
  func.func @_attn_meanpool_kernel(%arg0: i32, %arg1: i32, %arg2: memref<2x8x128xf32, #tpu.memory_space<vmem>>, %arg3: memref<128x384xbf16, #tpu.memory_space<vmem>>, %arg4: memref<1x384xf32, #tpu.memory_space<vmem>>, %arg5: memref<2x128xf32, #tpu.memory_space<vmem>>, %arg6: memref<16x384xf32, #tpu.memory_space<vmem>>) attributes {dimension_semantics = [#tpu.dimension_semantics<parallel>, #tpu.dimension_semantics<arbitrary>], iteration_bounds = array<i64: 1, 1>, scalar_prefetch = 0 : i64, scratch_operands = 1 : i64, tpu.core_type = #tpu.core_type<tc>, window_params = [{transform_indices = @transform_0, window_bounds = array<i64: 2, 8, 128>}, {transform_indices = @transform_1, window_bounds = array<i64: 128, 384>}, {pipeline_mode = #tpu.pipeline_mode<synchronous>, transform_indices = @transform_2, window_bounds = array<i64: 1, 384>}, {transform_indices = @transform_3, window_bounds = array<i64: 2, 128>}]} {
    %c0_i32 = arith.constant 0 : i32
    %0 = arith.cmpi eq, %arg1, %c0_i32 : i32
    %1 = arith.extui %0 : i1 to i32
    %c0_i32_0 = arith.constant 0 : i32
    %2 = arith.cmpi ne, %1, %c0_i32_0 : i32
    scf.if %2 {
      %c0_11 = arith.constant 0 : index
      %c0_12 = arith.constant 0 : index
      %14 = vector.load %arg4[%c0_11, %c0_12] : memref<1x384xf32, #tpu.memory_space<vmem>>, vector<1x384xf32>
      %15 = vector.shape_cast %14 : vector<1x384xf32> to vector<1x384xf32>
      %16 = vector.broadcast %15 : vector<1x384xf32> to vector<16x384xf32>
      %c0_13 = arith.constant 0 : index
      %c0_14 = arith.constant 0 : index
      %17 = vector.load %arg6[%c0_13, %c0_14] : memref<16x384xf32, #tpu.memory_space<vmem>>, vector<16x384xf32>
      tpu.vector_store %arg6[%c0_13, %c0_14], %16 {strides = array<i32>} : memref<16x384xf32, #tpu.memory_space<vmem>>, vector<16x384xf32>,
    } else {
    }
    %c0 = arith.constant 0 : index
    %c0_1 = arith.constant 0 : index
    %c0_2 = arith.constant 0 : index
    %3 = vector.load %arg2[%c0, %c0_1, %c0_2] : memref<2x8x128xf32, #tpu.memory_space<vmem>>, vector<2x8x128xf32>
    %4 = vector.shape_cast %3 : vector<2x8x128xf32> to vector<16x128xf32>
    %5 = arith.truncf %4 : vector<16x128xf32> to vector<16x128xbf16>
    %c0_3 = arith.constant 0 : index
    %c0_4 = arith.constant 0 : index
    %6 = vector.load %arg6[%c0_3, %c0_4] : memref<16x384xf32, #tpu.memory_space<vmem>>, vector<16x384xf32>
    %c0_5 = arith.constant 0 : index
    %c0_6 = arith.constant 0 : index
    %7 = vector.load %arg3[%c0_5, %c0_6] : memref<128x384xbf16, #tpu.memory_space<vmem>>, vector<128x384xbf16>
    %cst = arith.constant dense<0.000000e+00> : vector<16x384xf32>
    %8 = tpu.matmul %5, %7, %cst {dimension_numbers = #tpu.dot_dimension_numbers<[1], [0], [0], [1], [0, 0, 1, 1], [], []>} : vector<16x128xbf16>, vector<128x384xbf16>, vector<16x384xf32> -> vector<16x384xf32>
    %9 = arith.addf %6, %8 : vector<16x384xf32>
    %c0_7 = arith.constant 0 : index
    %c0_8 = arith.constant 0 : index
    %10 = vector.load %arg6[%c0_7, %c0_8] : memref<16x384xf32, #tpu.memory_space<vmem>>, vector<16x384xf32>
    tpu.vector_store %arg6[%c0_7, %c0_8], %9 {strides = array<i32>} : memref<16x384xf32, #tpu.memory_space<vmem>>, vector<16x384xf32>,
    %c0_i32_9 = arith.constant 0 : i32
    %11 = arith.cmpi eq, %arg1, %c0_i32_9 : i32
    %12 = arith.extui %11 : i1 to i32
    %c0_i32_10 = arith.constant 0 : i32
    %13 = arith.cmpi ne, %12, %c0_i32_10 : i32
    scf.if %13 {
      %c0_11 = arith.constant 0 : index
      %c0_12 = arith.constant 0 : index
      %14 = vector.load %arg6[%c0_11, %c0_12] : memref<16x384xf32, #tpu.memory_space<vmem>>, vector<16x384xf32>
      %15 = vector.shape_cast %14 : vector<16x384xf32> to vector<2x8x384xf32>
      %16 = vector.extract_strided_slice %15 {offsets = [0, 0, 0], sizes = [2, 8, 128], strides = [1, 1, 1]} : vector<2x8x384xf32> to vector<2x8x128xf32>
      %17 = arith.truncf %16 : vector<2x8x128xf32> to vector<2x8x128xbf16>
      %18 = vector.extract_strided_slice %15 {offsets = [0, 0, 128], sizes = [2, 8, 128], strides = [1, 1, 1]} : vector<2x8x384xf32> to vector<2x8x128xf32>
      %19 = arith.truncf %18 : vector<2x8x128xf32> to vector<2x8x128xbf16>
      %20 = vector.extract_strided_slice %15 {offsets = [0, 0, 256], sizes = [2, 8, 128], strides = [1, 1, 1]} : vector<2x8x384xf32> to vector<2x8x128xf32>
      %21 = arith.truncf %20 : vector<2x8x128xf32> to vector<2x8x128xbf16>
      "tpu.trace_start"() <{level = 10 : i32, message = "bqd,bkd->bqk"}> : () -> ()
      %cst_13 = arith.constant dense<0.000000e+00> : vector<2x8x8xf32>
      %22 = tpu.matmul %17, %19, %cst_13 {dimension_numbers = #tpu.dot_dimension_numbers<[2], [2], [1], [1], [0, 0, 0, 1, 1, 1], [0], [0]>} : vector<2x8x128xbf16>, vector<2x8x128xbf16>, vector<2x8x8xf32> -> vector<2x8x8xf32>
      "tpu.trace_stop"() : () -> ()
      %cst_14 = arith.constant dense<0xFF800000> : vector<2x8xf32>
      %23 = vector.multi_reduction <maximumf>, %22, %cst_14 [2] : vector<2x8x8xf32> to vector<2x8xf32>
      %24 = vector.shape_cast %23 : vector<2x8xf32> to vector<2x8x1xf32>
      %25 = vector.broadcast %24 : vector<2x8x1xf32> to vector<2x8x8xf32>
      %26 = arith.subf %22, %25 : vector<2x8x8xf32>
      %27 = math.exp %26 : vector<2x8x8xf32>
      %cst_15 = arith.constant dense<0.000000e+00> : vector<2x8xf32>
      %28 = vector.multi_reduction <add>, %27, %cst_15 [2] : vector<2x8x8xf32> to vector<2x8xf32>
      %29 = vector.shape_cast %28 : vector<2x8xf32> to vector<2x8x1xf32>
      %30 = tpu.reciprocal %29 {approx = true} : vector<2x8x1xf32> -> vector<2x8x1xf32>
      %31 = vector.broadcast %30 : vector<2x8x1xf32> to vector<2x8x8xf32>
      %32 = arith.mulf %27, %31 : vector<2x8x8xf32>
      %cst_16 = arith.constant dense<0.000000e+00> : vector<2x8xf32>
      %33 = vector.multi_reduction <add>, %32, %cst_16 [1] : vector<2x8x8xf32> to vector<2x8xf32>
      %34 = vector.shape_cast %33 : vector<2x8xf32> to vector<2x1x8xf32>
      %cst_17 = arith.constant 8.000000e+00 : f32
      %35 = vector.broadcast %cst_17 : f32 to vector<2x1x8xf32>
      %36 = arith.divf %34, %35 : vector<2x1x8xf32>
      %37 = arith.truncf %36 : vector<2x1x8xf32> to vector<2x1x8xbf16>
      "tpu.trace_start"() <{level = 10 : i32, message = "bqk,bkd->bqd"}> : () -> ()
      %cst_18 = arith.constant dense<0.000000e+00> : vector<2x1x128xf32>
      %38 = tpu.matmul %37, %21, %cst_18 {dimension_numbers = #tpu.dot_dimension_numbers<[2], [1], [1], [2], [0, 0, 0, 1, 1, 2], [0], [0]>} : vector<2x1x8xbf16>, vector<2x8x128xbf16>, vector<2x1x128xf32> -> vector<2x1x128xf32>
      "tpu.trace_stop"() : () -> ()
      %39 = vector.shape_cast %38 : vector<2x1x128xf32> to vector<2x128xf32>
      %c0_19 = arith.constant 0 : index
      %c0_20 = arith.constant 0 : index
      %40 = vector.load %arg5[%c0_19, %c0_20] : memref<2x128xf32, #tpu.memory_space<vmem>>, vector<2x128xf32>
      tpu.vector_store %arg5[%c0_19, %c0_20], %39 {strides = array<i32>} : memref<2x128xf32, #tpu.memory_space<vmem>>, vector<2x128xf32>,
    } else {
    }
    return
  }
  func.func @transform_0(%arg0: i32, %arg1: i32) -> (i32, i32, i32) {
    %c0_i32 = arith.constant 0 : i32
    %c0_i32_0 = arith.constant 0 : i32
    return %arg0, %c0_i32, %arg1 : i32, i32, i32
  }
  func.func @transform_1(%arg0: i32, %arg1: i32) -> (i32, i32) {
    %c0_i32 = arith.constant 0 : i32
    %c0_i32_0 = arith.constant 0 : i32
    return %arg1, %c0_i32 : i32, i32
  }
  func.func @transform_2(%arg0: i32, %arg1: i32) -> (i32, i32) {
    %c0_i32 = arith.constant 0 : i32
    %c0_i32_0 = arith.constant 0 : i32
    %c0_i32_1 = arith.constant 0 : i32
    return %c0_i32, %c0_i32_0 : i32, i32
  }
  func.func @transform_3(%arg0: i32, %arg1: i32) -> (i32, i32) {
    %c0_i32 = arith.constant 0 : i32
    %c0_i32_0 = arith.constant 0 : i32
    return %arg0, %c0_i32 : i32, i32
  }
}

</mosaic_0001>

<llo_original>
// kernel: tpu_custom_call.1
$region0: #{tpu_custom_call.1}
  #allocation0 [shape = 'u32[]', space=smem, size = 0x4, offset = 0x4, fixed_abs, tag = 'smem constant byte address 0x4 - core index']
  #allocation1 [shape = 'u32[72,128]{1,0:T(1,128)}', space=vmem, size = 0x9000, scoped, tag = 'internal scratch']
  #allocation2 [shape = 'f32[16,384]{1,0:T(8,128)}', space=vmem, size = 0x6000, scoped, tag = 'scratch operand']
  %s0 = inlined_call_operand.hbm [shape: f32[2,8,128], index: 0, kind: input, shape index: {}]
  %s1 = inlined_call_operand.hbm [shape: bf16[128,384], index: 1, kind: input, shape index: {}]
  %s2 = inlined_call_operand.hbm [shape: f32[1,384], index: 2, kind: input, shape index: {}]
  %s3 = inlined_call_operand.hbm [shape: f32[2,128], index: 3, kind: output, shape index: {}]
  %s4 = sld [smem:[#allocation0]]
  $region42: #{tpu_custom_call.1} parent=0
    _
  %s6 = ssub.s32 1, %s4
  %s7 = scalar_select 0, %s6, %s4
  $region1: #{tpu_custom_call.1} parent=0
    #allocation3 [shape = 'u8[8192]{0}', space=vmem, size = 0x2000, scoped, tag = 'input window, operand 0, single buffered']
    #allocation4 [shape = 's32[1]{0}', space=sflag, size = 0x4, scoped, tag = 'scoped memory for tpu_custom_call.1']
    #allocation5 [shape = 's32[1]{0}', space=sflag, size = 0x4, scoped, tag = 'scoped memory for tpu_custom_call.1']
    #allocation6 [shape = 'u8[98304]{0}', space=vmem, size = 0x18000, scoped, tag = 'input window, operand 1, single buffered']
    #allocation7 [shape = 's32[1]{0}', space=sflag, size = 0x4, scoped, tag = 'scoped memory for tpu_custom_call.1']
    #allocation8 [shape = 'u8[1536]{0}', space=vmem, size = 0x800, scoped, tag = 'input window, operand 2, single buffered']
    #allocation9 [shape = 'u8[1024]{0}', space=vmem, size = 0x400, scoped, tag = 'output window, operand 0, single buffered']
    %8 = vsyncpa [#allocation4], 0
    %9 = vsyncpa [#allocation7], 0
    %10 = vsyncpa [#allocation5], 0
    // Predicated region
    $region2: #{tpu_custom_call.1} parent=1 // pred_check
      _
    $region3: #{tpu_custom_call.1} parent=1 // pred_check_branch
      %12 = sbr.rel (0) target = $region5
    $region4: #{tpu_custom_call.1} parent=1 // pred_region
      %14 = vsyncadd [#allocation4], 0
      %s15 = sshll.u32 %s0, 4
      %s16 = int_to_ptr.hbm [resolvable:$true] %s15
      %s17 = sshll.u32 [#allocation3], 4
      %s18 = int_to_ptr.vmem [resolvable:$true] %s17
      %23 = dma.hbm_to_vmem [thread:$0]  %s16, 256, %s18, [#allocation4], 128, 128, 8
    $region5: #{tpu_custom_call.1} parent=1 // pred_fallthru
      _
    // Predicated region
    $region6: #{tpu_custom_call.1} parent=1 // pred_check
      _
    $region7: #{tpu_custom_call.1} parent=1 // pred_check_branch
      %25 = sbr.rel (0) target = $region9
    $region8: #{tpu_custom_call.1} parent=1 // pred_region
      %27 = vsyncadd [#allocation7], 0
      %s28 = sshll.u32 %s1, 4
      %s29 = int_to_ptr.hbm [resolvable:$true] %s28
      %s30 = sshll.u32 [#allocation6], 4
      %s31 = int_to_ptr.vmem [resolvable:$true] %s30
      %36 = dma.hbm_to_vmem [thread:$0]  %s29, 3072, %s31, [#allocation7], 192, 192, 12
    $region9: #{tpu_custom_call.1} parent=1 // pred_fallthru
      _
    // Predicated region
    $region10: #{tpu_custom_call.1} parent=1 // pred_check
      _
    $region11: #{tpu_custom_call.1} parent=1 // pred_check_branch
      %38 = sbr.rel (0) target = $region13
    $region12: #{tpu_custom_call.1} parent=1 // pred_region
      %40 = vsyncadd [#allocation7], 0
      %s42 = sshll.u32 %s2, 4
      %s43 = int_to_ptr.hbm [resolvable:$true] %s42
      %s44 = sshll.u32 [#allocation8], 4
      %s45 = int_to_ptr.vmem [resolvable:$true] %s44
      %47 = dma.hbm_to_vmem [thread:$0]  %s43, 48, %s45, [#allocation7]
    $region13: #{tpu_custom_call.1} parent=1 // pred_fallthru
      _
    // Predicated region
    $region14: #{tpu_custom_call.1} parent=1 // pred_check
      _
    $region15: #{tpu_custom_call.1} parent=1 // pred_check_branch
      %49 = sbr.rel (0) target = $region17
    $region16: #{tpu_custom_call.1} parent=1 // pred_region
      %51 = dma.done [#allocation4], 256
    $region17: #{tpu_custom_call.1} parent=1 // pred_fallthru
      _
    // Predicated region
    $region18: #{tpu_custom_call.1} parent=1 // pred_check
      _
    $region19: #{tpu_custom_call.1} parent=1 // pred_check_branch
      %53 = sbr.rel (0) target = $region21
    $region20: #{tpu_custom_call.1} parent=1 // pred_region
      %55 = dma.done [#allocation7], 3072
    $region21: #{tpu_custom_call.1} parent=1 // pred_fallthru
      _
    // Predicated region
    $region22: #{tpu_custom_call.1} parent=1 // pred_check
      _
    $region23: #{tpu_custom_call.1} parent=1 // pred_check_branch
      %57 = sbr.rel (0) target = $region25
    $region24: #{tpu_custom_call.1} parent=1 // pred_region
      %59 = dma.done [#allocation7], 48
    $region25: #{tpu_custom_call.1} parent=1 // pred_fallthru
      _
    %p61 = scmp.eq.s32.totalorder 0, 0
    // Predicated region
    $region26: #{tpu_custom_call.1} parent=1 // pred_check
      %p62 = pneg %p61
    $region27: #{tpu_custom_call.1} parent=1 // pred_check_branch
      %64 = sbr.rel (%p62) target = $region29
    $region28: #{tpu_custom_call.1} parent=1 // pred_region
      %v65 = vld [vmem:[#allocation8] sm:$0x7]
      %v67 = vperm.slane %v65, 0
      %v68 = vperm.slane %v65, 1
      %v69 = vperm.slane %v65, 2
      %73 = vst [vmem:[#allocation2] sm:$0xff] %v67
      %74 = vst [vmem:[#allocation2 + $0x8] sm:$0xff] %v68
      %75 = vst [vmem:[#allocation2 + $0x10] sm:$0xff] %v69
      %76 = vst [vmem:[#allocation2 + $0x18] sm:$0xff] %v67
      %77 = vst [vmem:[#allocation2 + $0x20] sm:$0xff] %v68
      %78 = vst [vmem:[#allocation2 + $0x28] sm:$0xff] %v69
    $region29: #{tpu_custom_call.1} parent=1 // pred_fallthru
      _
    %v79 = vld [vmem:[#allocation3] sm:$0xff]
    %v80 = vld [vmem:[#allocation3 + $0x8] sm:$0xff]
    %v81 = vpack.c.bf16 %v80, %v79
    %v82 = vld [vmem:[#allocation2] sm:$0xff]
    %v83 = vld [vmem:[#allocation2 + $0x8] sm:$0xff]
    %v84 = vld [vmem:[#allocation2 + $0x10] sm:$0xff]
    %v85 = vld [vmem:[#allocation2 + $0x18] sm:$0xff]
    %v86 = vld [vmem:[#allocation2 + $0x20] sm:$0xff]
    %v87 = vld [vmem:[#allocation2 + $0x28] sm:$0xff]
    %v88 = vld [vmem:[#allocation6] sm:$0xff]
    %v89 = vld [vmem:[#allocation6 + $0x8] sm:$0xf]
    %v90 = vld [vmem:[#allocation6 + $0xc] sm:$0xff]
    %v91 = vld [vmem:[#allocation6 + $0x14] sm:$0xf]
    %v92 = vld [vmem:[#allocation6 + $0x18] sm:$0xff]
    %v93 = vld [vmem:[#allocation6 + $0x20] sm:$0xf]
    %v94 = vld [vmem:[#allocation6 + $0x24] sm:$0xff]
    %v95 = vld [vmem:[#allocation6 + $0x2c] sm:$0xf]
    %v96 = vld [vmem:[#allocation6 + $0x30] sm:$0xff]
    %v97 = vld [vmem:[#allocation6 + $0x38] sm:$0xf]
    %v98 = vld [vmem:[#allocation6 + $0x3c] sm:$0xff]
    %v99 = vld [vmem:[#allocation6 + $0x44] sm:$0xf]
    %v100 = vld [vmem:[#allocation6 + $0x48] sm:$0xff]
    %v101 = vld [vmem:[#allocation6 + $0x50] sm:$0xf]
    %v102 = vld [vmem:[#allocation6 + $0x54] sm:$0xff]
    %v103 = vld [vmem:[#allocation6 + $0x5c] sm:$0xf]
    %v104 = vld [vmem:[#allocation6 + $0x60] sm:$0xff]
    %v105 = vld [vmem:[#allocation6 + $0x68] sm:$0xf]
    %v106 = vld [vmem:[#allocation6 + $0x6c] sm:$0xff]
    %v107 = vld [vmem:[#allocation6 + $0x74] sm:$0xf]
    %v108 = vld [vmem:[#allocation6 + $0x78] sm:$0xff]
    %v109 = vld [vmem:[#allocation6 + $0x80] sm:$0xf]
    %v110 = vld [vmem:[#allocation6 + $0x84] sm:$0xff]
    %v111 = vld [vmem:[#allocation6 + $0x8c] sm:$0xf]
    %v112 = vld [vmem:[#allocation6 + $0x90] sm:$0xff]
    %v113 = vld [vmem:[#allocation6 + $0x98] sm:$0xf]
    %v114 = vld [vmem:[#allocation6 + $0x9c] sm:$0xff]
    %v115 = vld [vmem:[#allocation6 + $0xa4] sm:$0xf]
    %v116 = vld [vmem:[#allocation6 + $0xa8] sm:$0xff]
    %v117 = vld [vmem:[#allocation6 + $0xb0] sm:$0xf]
    %v118 = vld [vmem:[#allocation6 + $0xb4] sm:$0xff]
    %v119 = vld [vmem:[#allocation6 + $0xbc] sm:$0xf]
    %v152 = vunpack.c.l.b16 %v88
    %v153 = vunpack.c.h.b16 %v88
    %v154 = vunpack.c.l.b16 %v89
    %v155 = vunpack.c.l.b16 %v90
    %v156 = vunpack.c.h.b16 %v90
    %v157 = vunpack.c.l.b16 %v91
    %v158 = vunpack.c.l.b16 %v92
    %v159 = vunpack.c.h.b16 %v92
    %v160 = vunpack.c.l.b16 %v93
    %v161 = vunpack.c.l.b16 %v94
    %v162 = vunpack.c.h.b16 %v94
    %v163 = vunpack.c.l.b16 %v95
    %v164 = vunpack.c.l.b16 %v96
    %v165 = vunpack.c.h.b16 %v96
    %v166 = vunpack.c.l.b16 %v97
    %v167 = vunpack.c.l.b16 %v98
    %v168 = vunpack.c.h.b16 %v98
    %v169 = vunpack.c.l.b16 %v99
    %v170 = vunpack.c.l.b16 %v100
    %v171 = vunpack.c.h.b16 %v100
    %v172 = vunpack.c.l.b16 %v101
    %v173 = vunpack.c.l.b16 %v102
    %v174 = vunpack.c.h.b16 %v102
    %v175 = vunpack.c.l.b16 %v103
    %v176 = vunpack.c.l.b16 %v104
    %v177 = vunpack.c.h.b16 %v104
    %v178 = vunpack.c.l.b16 %v105
    %v179 = vunpack.c.l.b16 %v106
    %v180 = vunpack.c.h.b16 %v106
    %v181 = vunpack.c.l.b16 %v107
    %v182 = vunpack.c.l.b16 %v108
    %v183 = vunpack.c.h.b16 %v108
    %v184 = vunpack.c.l.b16 %v109
    %v185 = vunpack.c.l.b16 %v110
    %v186 = vunpack.c.h.b16 %v110
    %v187 = vunpack.c.l.b16 %v111
    %v188 = vunpack.c.l.b16 %v112
    %v189 = vunpack.c.h.b16 %v112
    %v190 = vunpack.c.l.b16 %v113
    %v191 = vunpack.c.l.b16 %v114
    %v192 = vunpack.c.h.b16 %v114
    %v193 = vunpack.c.l.b16 %v115
    %v194 = vunpack.c.l.b16 %v116
    %v195 = vunpack.c.h.b16 %v116
    %v196 = vunpack.c.l.b16 %v117
    %v197 = vunpack.c.l.b16 %v118
    %v198 = vunpack.c.h.b16 %v118
    %v199 = vunpack.c.l.b16 %v119
    %v200 = vpack.c.b16 %v155, %v152
    %v201 = vpack.c.b16 %v156, %v153
    %v202 = vpack.c.b16 %v157, %v154
    %v203 = vpack.c.b16 %v161, %v158
    %v204 = vpack.c.b16 %v162, %v159
    %v205 = vpack.c.b16 %v163, %v160
    %v206 = vpack.c.b16 %v167, %v164
    %v207 = vpack.c.b16 %v168, %v165
    %v208 = vpack.c.b16 %v169, %v166
    %v209 = vpack.c.b16 %v173, %v170
    %v210 = vpack.c.b16 %v174, %v171
    %v211 = vpack.c.b16 %v175, %v172
    %v212 = vpack.c.b16 %v179, %v176
    %v213 = vpack.c.b16 %v180, %v177
    %v214 = vpack.c.b16 %v181, %v178
    %v215 = vpack.c.b16 %v185, %v182
    %v216 = vpack.c.b16 %v186, %v183
    %v217 = vpack.c.b16 %v187, %v184
    %v218 = vpack.c.b16 %v191, %v188
    %v219 = vpack.c.b16 %v192, %v189
    %v220 = vpack.c.b16 %v193, %v190
    %v221 = vpack.c.b16 %v197, %v194
    %v222 = vpack.c.b16 %v198, %v195
    %v223 = vpack.c.b16 %v199, %v196
    %248 = vmatpush.bf16.msra.mxu0 %v221
    %249 = vmatpush.bf16.msra.mxu0 %v218
    %250 = vmatpush.bf16.msra.mxu0 %v215
    %251 = vmatpush.bf16.msra.mxu0 %v212
    %252 = vmatpush.bf16.msra.mxu0 %v209
    %253 = vmatpush.bf16.msra.mxu0 %v206
    %254 = vmatpush.bf16.msra.mxu0 %v203
    %255 = vmatpush.bf16.msra.mxu0 %v200
    %256 = vmatmul.bf16.gmra.mxu0 %v81
    %v257 = vpop.f32.mrf.mxu0
    %v258 = vadd.f32 0.0, %v257
    %v259 = vpop.f32.mrf.mxu0
    %v260 = vadd.f32 0.0, %v259
    %261 = vdwg.mxu0
    %262 = vmatpush.bf16.msra.mxu0 %v222
    %263 = vmatpush.bf16.msra.mxu0 %v219
    %264 = vmatpush.bf16.msra.mxu0 %v216
    %265 = vmatpush.bf16.msra.mxu0 %v213
    %266 = vmatpush.bf16.msra.mxu0 %v210
    %267 = vmatpush.bf16.msra.mxu0 %v207
    %268 = vmatpush.bf16.msra.mxu0 %v204
    %269 = vmatpush.bf16.msra.mxu0 %v201
    %270 = vmatmul.bf16.gmra.mxu0 %v81
    %v271 = vpop.f32.mrf.mxu0
    %v272 = vadd.f32 0.0, %v271
    %v273 = vpop.f32.mrf.mxu0
    %v274 = vadd.f32 0.0, %v273
    %275 = vdwg.mxu0
    %276 = vmatpush.bf16.msra.mxu0 %v223
    %277 = vmatpush.bf16.msra.mxu0 %v220
    %278 = vmatpush.bf16.msra.mxu0 %v217
    %279 = vmatpush.bf16.msra.mxu0 %v214
    %280 = vmatpush.bf16.msra.mxu0 %v211
    %281 = vmatpush.bf16.msra.mxu0 %v208
    %282 = vmatpush.bf16.msra.mxu0 %v205
    %283 = vmatpush.bf16.msra.mxu0 %v202
    %284 = vmatmul.bf16.gmra.mxu0 %v81
    %v285 = vpop.f32.mrf.mxu0
    %v286 = vadd.f32 0.0, %v285
    %v287 = vpop.f32.mrf.mxu0
    %v288 = vadd.f32 0.0, %v287
    %289 = vdwg.mxu0
    %v290 = vadd.f32 %v82, %v258
    %v291 = vadd.f32 %v83, %v272
    %v292 = vadd.f32 %v84, %v286
    %v293 = vadd.f32 %v85, %v260
    %v294 = vadd.f32 %v86, %v274
    %v295 = vadd.f32 %v87, %v288
    %296 = vst [vmem:[#allocation2] sm:$0xff] %v290
    %297 = vst [vmem:[#allocation2 + $0x8] sm:$0xff] %v291
    %298 = vst [vmem:[#allocation2 + $0x10] sm:$0xff] %v292
    %299 = vst [vmem:[#allocation2 + $0x18] sm:$0xff] %v293
    %300 = vst [vmem:[#allocation2 + $0x20] sm:$0xff] %v294
    %301 = vst [vmem:[#allocation2 + $0x28] sm:$0xff] %v295
    // Predicated region
    $region30: #{tpu_custom_call.1} parent=1 // pred_check
      %p302 = pneg %p61
    $region31: #{tpu_custom_call.1} parent=1 // pred_check_branch
      %304 = sbr.rel (%p302) target = $region33
    $region32: #{tpu_custom_call.1} parent=1 // pred_region
      %v305 = vld [vmem:[#allocation2] sm:$0xff]
      %v306 = vld [vmem:[#allocation2 + $0x8] sm:$0xff]
      %v307 = vld [vmem:[#allocation2 + $0x10] sm:$0xff]
      %v308 = vld [vmem:[#allocation2 + $0x18] sm:$0xff]
      %v309 = vld [vmem:[#allocation2 + $0x20] sm:$0xff]
      %v310 = vld [vmem:[#allocation2 + $0x28] sm:$0xff]
      %v311 = vpack.c.bf16 %v305, %v305
      %v312 = vpack.c.bf16 %v308, %v308
      %v313 = vpack.c.bf16 %v306, %v306
      %v314 = vpack.c.bf16 %v309, %v309
      %v315 = vpack.c.bf16 %v307, %v307
      %v316 = vpack.c.bf16 %v310, %v310
      %317 = vmatpush.bf16.xpose.msra.mxu0 0
      %318 = vmatpush.bf16.xpose.msra.mxu0 0
      %319 = vmatpush.bf16.xpose.msra.mxu0 0
      %320 = vmatpush.bf16.xpose.msra.mxu0 0
      %321 = vmatpush.bf16.xpose.msra.mxu0 0
      %322 = vmatpush.bf16.xpose.msra.mxu0 0
      %323 = vmatpush.bf16.xpose.msra.mxu0 0
      %324 = vmatpush.bf16.xpose.msra.mxu0 %v313
      %325 = vmatmul.bf16.gmra.mxu0 %v311
      %v326 = vpop.f32.mrf.mxu0
      %v327 = vadd.f32 0.0, %v326
      %v328 = vpop.f32.mrf.mxu0
      %329 = vdwg.mxu0
      %330 = vmatpush.bf16.xpose.msra.mxu0 0
      %331 = vmatpush.bf16.xpose.msra.mxu0 0
      %332 = vmatpush.bf16.xpose.msra.mxu0 0
      %333 = vmatpush.bf16.xpose.msra.mxu0 0
      %334 = vmatpush.bf16.xpose.msra.mxu0 0
      %335 = vmatpush.bf16.xpose.msra.mxu0 0
      %336 = vmatpush.bf16.xpose.msra.mxu0 0
      %337 = vmatpush.bf16.xpose.msra.mxu0 %v314
      %338 = vmatmul.bf16.gmra.mxu0 %v312
      %v339 = vpop.f32.mrf.mxu0
      %v340 = vadd.f32 0.0, %v339
      %v341 = vpop.f32.mrf.mxu0
      %342 = vdwg.mxu0
      %vm343 = vcmask 64512
      %v344 = vsel %vm343, %v327, -inf
      %345 = vmax.xlane.f32.xlu0 %v344
      %v346 = vpop.xlane.xlu0 %345
      %v347 = vsel %vm343, %v340, -inf
      %348 = vmax.xlane.f32.xlu0 %v347
      %v349 = vpop.xlane.xlu0 %348
      %v350 = vsub.f32 %v327, %v346
      %v351 = vsub.f32 %v340, %v349
      %v352 = vmul.f32 %v350, 1.442695
      %v353 = vpow.pop %v352
      %v354 = vmul.f32 %v351, 1.442695
      %v355 = vpow.pop %v354
      %v356 = vsel %vm343, %v353, 0.0
      %357 = vadd.xlane.f32.xlu0 %v356
      %v358 = vpop.xlane.xlu0 %357
      %v359 = vsel %vm343, %v355, 0.0
      %360 = vadd.xlane.f32.xlu0 %v359
      %v361 = vpop.xlane.xlu0 %360
      %v362 = vrcp.pop %v358
      %v363 = vrcp.pop %v361
      %v364 = vmul.f32 %v353, %v362
      %v365 = vmul.f32 %v355, %v363
      %v366 = vsel %vm343, %v364, 0.0
      %v367 = vrot.slane %v366, 4
      %v368 = vadd.f32 %v366, %v367
      %v369 = vrot.slane %v368, 2
      %v370 = vadd.f32 %v368, %v369
      %v371 = vrot.slane %v370, 1
      %v372 = vadd.f32 %v370, %v371
      %v373 = vsel %vm343, %v365, 0.0
      %v374 = vrot.slane %v373, 4
      %v375 = vadd.f32 %v373, %v374
      %v376 = vrot.slane %v375, 2
      %v377 = vadd.f32 %v375, %v376
      %v378 = vrot.slane %v377, 1
      %v379 = vadd.f32 %v377, %v378
      %v380 = vrcp.pop 8.0
      %v381 = vmul.f32 8.0, %v380
      %v382 = vsub.f32 1.0, %v381
      %v383 = vmul.f32 %v380, %v382
      %v384 = vadd.f32 %v380, %v383
      %vm385 = vweird.f32 %v380
      %v386 = vsel %vm385, %v380, %v384
      %v387 = vmul.f32 %v372, %v386
      %v388 = vmul.f32 %v379, %v386
      %v389 = vpack.c.bf16 %v387, %v387
      %v390 = vpack.c.bf16 %v388, %v388
      %v392 = vsel %vm343, %v389, 0
      %vm394 = vcmask 1043456
      %v396 = vsel %vm394, %v315, 0
      %398 = vmatpush.bf16.msra.mxu0 0
      %399 = vmatpush.bf16.msra.mxu0 0
      %400 = vmatpush.bf16.msra.mxu0 0
      %401 = vmatpush.bf16.msra.mxu0 0
      %402 = vmatpush.bf16.msra.mxu0 0
      %403 = vmatpush.bf16.msra.mxu0 0
      %404 = vmatpush.bf16.msra.mxu0 0
      %405 = vmatpush.bf16.msra.mxu0 %v396
      %406 = vmatmul.bf16.gmra.mxu0 %v392
      %v407 = vpop.f32.mrf.mxu0
      %v408 = vadd.f32 0.0, %v407
      %v409 = vpop.f32.mrf.mxu0
      %410 = vdwg.mxu0
      %v412 = vsel %vm343, %v390, 0
      %v415 = vsel %vm394, %v316, 0
      %417 = vmatpush.bf16.msra.mxu0 0
      %418 = vmatpush.bf16.msra.mxu0 0
      %419 = vmatpush.bf16.msra.mxu0 0
      %420 = vmatpush.bf16.msra.mxu0 0
      %421 = vmatpush.bf16.msra.mxu0 0
      %422 = vmatpush.bf16.msra.mxu0 0
      %423 = vmatpush.bf16.msra.mxu0 0
      %424 = vmatpush.bf16.msra.mxu0 %v415
      %425 = vmatmul.bf16.gmra.mxu0 %v412
      %v426 = vpop.f32.mrf.mxu0
      %v427 = vadd.f32 0.0, %v426
      %v428 = vpop.f32.mrf.mxu0
      %429 = vdwg.mxu0
      %v432 = vrot.slane %v427, 7
      %vm433 = vcmask 1041409
      %v434 = vsel %vm433, %v432, %v408
      %436 = vst [vmem:[#allocation9] sm:$0x3] %v434
    $region33: #{tpu_custom_call.1} parent=1 // pred_fallthru
      _
    // Predicated region
    $region34: #{tpu_custom_call.1} parent=1 // pred_check
      _
    $region35: #{tpu_custom_call.1} parent=1 // pred_check_branch
      %438 = sbr.rel (0) target = $region37
    $region36: #{tpu_custom_call.1} parent=1 // pred_region
      %440 = vsyncadd [#allocation5], 0
      %s442 = sshll.u32 [#allocation9], 4
      %s443 = int_to_ptr.vmem [resolvable:$true] %s442
      %s444 = sshll.u32 %s3, 4
      %s445 = int_to_ptr.hbm [resolvable:$true] %s444
      %447 = dma.vmem_to_hbm [thread:$0]  %s443, 32, %s445, [#allocation5]
    $region37: #{tpu_custom_call.1} parent=1 // pred_fallthru
      _
    // Predicated region
    $region38: #{tpu_custom_call.1} parent=1 // pred_check
      _
    $region39: #{tpu_custom_call.1} parent=1 // pred_check_branch
      %449 = sbr.rel (0) target = $region41
    $region40: #{tpu_custom_call.1} parent=1 // pred_region
      %451 = dma.done [#allocation5], 32
    $region41: #{tpu_custom_call.1} parent=1 // pred_fallthru
      _
    %452 = vsyncpa [#allocation4], 1
    %453 = vsyncpa [#allocation7], 1
    %454 = vsyncpa [#allocation5], 1

</llo_original>
